<compile_context>
chip_gen: v6e
topology: v6e:2x2x1
jax: 0.10.0
libtpu: 0.0.40
codegen_flags: <defaults>
</compile_context>

<pallas_src>
import jax
import jax.numpy as jnp
from jax.experimental import pallas as pl
from jax.experimental.pallas import tpu as pltpu


def adapter_kernel(x_ref, w1_ref, w2_ref, o_ref):
    # hidden = relu(x @ W1.T)   (block-diagonal-packed weights when pack > 1)
    h = jnp.dot(x_ref[...], w1_ref[...], preferred_element_type=jnp.float32)
    h = jnp.maximum(h, 0.0)
    # out = relu(hidden @ W2.T)
    y = jnp.dot(h.astype(w2_ref.dtype), w2_ref[...],
                preferred_element_type=jnp.float32)
    y = jnp.maximum(y, 0.0)
    o_ref[...] = y.astype(o_ref.dtype)


def _round_up(a, b):
    return ((a + b - 1) // b) * b


def adapter_forward(x, w1, w2, *, tm=1024):
    """Adapter forward.

    x:  [N, C]           input rows
    w1: [H, C]           first Linear weight (PyTorch [out, in] layout), H = C // reduction
    w2: [C, H]           second Linear weight
    tm: row tile measured in *packed* rows (each packed row holds `pack`
        logical rows when C < 128).  Main tuning knob; 512-2048 is a good range.

    Returns relu(relu(x @ w1.T) @ w2.T), shape [N, C].
    """
    N, C = x.shape
    H = w1.shape[0]
    assert w1.shape == (H, C) and w2.shape == (C, H)

    dtype = x.dtype
    w1t = w1.T.astype(dtype)  # [C, H]
    w2t = w2.T.astype(dtype)  # [H, C]

    # ---- lane-density packing -------------------------------------------------
    # Fold `pack` consecutive rows into the 128-lane axis via block-diagonal
    # weights.  Exact for any input; skipped when C is already lane-friendly.
    if C < 128 and 128 % C == 0:
        pack = 128 // C
    else:
        pack = 1
    if pack > 1:
        eye = jnp.eye(pack, dtype=dtype)
        w1p = jnp.kron(eye, w1t)  # [pack*C, pack*H]
        w2p = jnp.kron(eye, w2t)  # [pack*H, pack*C]
    else:
        w1p, w2p = w1t, w2t
    Cp, Hp = pack * C, pack * H

    # ---- tiling / padding -----------------------------------------------------
    rows = pl.cdiv(N, pack)                                   # packed rows needed
    tm_eff = max(8, min(_round_up(tm, 8), _round_up(rows, 8)))  # sublane-aligned
    rows_pad = _round_up(rows, tm_eff)
    n_pad = rows_pad * pack

    xp = x
    if n_pad != N:
        xp = jnp.pad(x, ((0, n_pad - N), (0, 0)))  # zero rows: relu(0 @ W) = 0
    xp = xp.reshape(rows_pad, Cp)                  # row-major fold -> free reshape

    grid = (rows_pad // tm_eff,)
    dtype_bytes = jnp.dtype(dtype).itemsize
    cost = pl.CostEstimate(
        flops=4 * n_pad * C * H,                   # two N*C*H matmuls, 2 flops/MAC
        transcendentals=0,
        bytes_accessed=2 * n_pad * C * dtype_bytes + 2 * C * H * dtype_bytes,
    )

    yp = pl.pallas_call(
        adapter_kernel,
        out_shape=jax.ShapeDtypeStruct((rows_pad, Cp), dtype),
        grid_spec=pltpu.PrefetchScalarGridSpec(
            num_scalar_prefetch=0,
            grid=grid,
            in_specs=[
                pl.BlockSpec((tm_eff, Cp), lambda i: (i, 0)),  # x row tile (lane-dense)
                pl.BlockSpec((Cp, Hp), lambda i: (0, 0)),      # W1 (constant block -> one DMA)
                pl.BlockSpec((Hp, Cp), lambda i: (0, 0)),      # W2 (constant block -> one DMA)
            ],
            out_specs=pl.BlockSpec((tm_eff, Cp), lambda i: (i, 0)),
        ),
        compiler_params=pltpu.CompilerParams(
            dimension_semantics=("parallel",),     # shardable across v7x's 2 TCs
        ),
        cost_estimate=cost,
    )(xp, w1p, w2p)

    return yp.reshape(rows_pad * pack, C)[:N]


def _reference(x, w1, w2):
    return jnp.maximum(jnp.maximum(x @ w1.T, 0.0) @ w2.T, 0.0)


if __name__ == "__main__":
    # Small shapes consistent with the module: c_in=32, reduction=4 -> hidden=8.
    N, C_IN, REDUCTION = 16, 32, 4
    H = C_IN // REDUCTION

    key = jax.random.PRNGKey(0)
    kx, k1, k2 = jax.random.split(key, 3)
    x = jax.random.normal(kx, (N, C_IN), dtype=jnp.float32)
    # PyTorch Linear weight layout [out_features, in_features].
    w1 = jax.random.normal(k1, (H, C_IN), dtype=jnp.float32) * 0.1
    w2 = jax.random.normal(k2, (C_IN, H), dtype=jnp.float32) * 0.1

    out = adapter_forward(x, w1, w2)
    out = jax.block_until_ready(out)
    ref = _reference(x, w1, w2)
    assert out.shape == (N, C_IN)
    assert jnp.allclose(out, ref, atol=1e-5, rtol=1e-5), "mismatch vs reference"

    # Remainder handling: batch not divisible by the pack factor / tile.
    x_odd = jax.random.normal(kx, (10, C_IN), dtype=jnp.float32)
    out_odd = jax.block_until_ready(adapter_forward(x_odd, w1, w2))
    assert jnp.allclose(out_odd, _reference(x_odd, w1, w2), atol=1e-5, rtol=1e-5), \
        "mismatch vs reference (remainder batch)"

    print("KERNEL_OK")
</pallas_src>

<mosaic_0001>
module attributes {stable_mosaic.version = 11 : i64} {
  func.func @adapter_kernel(%arg0: i32, %arg1: memref<8x128xf32, #tpu.memory_space<vmem>>, %arg2: memref<128x32xf32, #tpu.memory_space<vmem>>, %arg3: memref<32x128xf32, #tpu.memory_space<vmem>>, %arg4: memref<8x128xf32, #tpu.memory_space<vmem>>) attributes {dimension_semantics = [#tpu.dimension_semantics<parallel>], iteration_bounds = array<i64: 1>, scalar_prefetch = 0 : i64, scratch_operands = 0 : i64, tpu.core_type = #tpu.core_type<tc>, window_params = [{transform_indices = @transform_0, window_bounds = array<i64: 8, 128>}, {pipeline_mode = #tpu.pipeline_mode<synchronous>, transform_indices = @transform_1, window_bounds = array<i64: 128, 32>}, {pipeline_mode = #tpu.pipeline_mode<synchronous>, transform_indices = @transform_2, window_bounds = array<i64: 32, 128>}, {transform_indices = @transform_3, window_bounds = array<i64: 8, 128>}]} {
    %c0 = arith.constant 0 : index
    %c0_0 = arith.constant 0 : index
    %0 = vector.load %arg1[%c0, %c0_0] : memref<8x128xf32, #tpu.memory_space<vmem>>, vector<8x128xf32>
    %c0_1 = arith.constant 0 : index
    %c0_2 = arith.constant 0 : index
    %1 = vector.load %arg2[%c0_1, %c0_2] : memref<128x32xf32, #tpu.memory_space<vmem>>, vector<128x32xf32>
    %cst = arith.constant dense<0.000000e+00> : vector<8x32xf32>
    %2 = tpu.matmul %0, %1, %cst {dimension_numbers = #tpu.dot_dimension_numbers<[1], [0], [0], [1], [0, 0, 1, 1], [], []>} : vector<8x128xf32>, vector<128x32xf32>, vector<8x32xf32> -> vector<8x32xf32>
    %cst_3 = arith.constant 0.000000e+00 : f32
    %3 = vector.broadcast %cst_3 : f32 to vector<8x32xf32>
    %4 = arith.maximumf %2, %3 : vector<8x32xf32>
    %c0_4 = arith.constant 0 : index
    %c0_5 = arith.constant 0 : index
    %5 = vector.load %arg3[%c0_4, %c0_5] : memref<32x128xf32, #tpu.memory_space<vmem>>, vector<32x128xf32>
    %cst_6 = arith.constant dense<0.000000e+00> : vector<8x128xf32>
    %6 = tpu.matmul %4, %5, %cst_6 {dimension_numbers = #tpu.dot_dimension_numbers<[1], [0], [0], [1], [0, 0, 1, 1], [], []>} : vector<8x32xf32>, vector<32x128xf32>, vector<8x128xf32> -> vector<8x128xf32>
    %cst_7 = arith.constant 0.000000e+00 : f32
    %7 = vector.broadcast %cst_7 : f32 to vector<8x128xf32>
    %8 = arith.maximumf %6, %7 : vector<8x128xf32>
    %c0_8 = arith.constant 0 : index
    %c0_9 = arith.constant 0 : index
    %9 = vector.load %arg4[%c0_8, %c0_9] : memref<8x128xf32, #tpu.memory_space<vmem>>, vector<8x128xf32>
    tpu.vector_store %arg4[%c0_8, %c0_9], %8 {strides = array<i32>} : memref<8x128xf32, #tpu.memory_space<vmem>>, vector<8x128xf32>,
    return
  }
  func.func @transform_0(%arg0: i32) -> (i32, i32) {
    %c0_i32 = arith.constant 0 : i32
    %c0_i32_0 = arith.constant 0 : i32
    return %arg0, %c0_i32 : i32, i32
  }
  func.func @transform_1(%arg0: i32) -> (i32, i32) {
    %c0_i32 = arith.constant 0 : i32
    %c0_i32_0 = arith.constant 0 : i32
    %c0_i32_1 = arith.constant 0 : i32
    return %c0_i32, %c0_i32_0 : i32, i32
  }
  func.func @transform_2(%arg0: i32) -> (i32, i32) {
    %c0_i32 = arith.constant 0 : i32
    %c0_i32_0 = arith.constant 0 : i32
    %c0_i32_1 = arith.constant 0 : i32
    return %c0_i32, %c0_i32_0 : i32, i32
  }
  func.func @transform_3(%arg0: i32) -> (i32, i32) {
    %c0_i32 = arith.constant 0 : i32
    %c0_i32_0 = arith.constant 0 : i32
    return %arg0, %c0_i32 : i32, i32
  }
}

</mosaic_0001>

<llo_original>
// kernel: tpu_custom_call.1
$region0: #{tpu_custom_call.1}
  #allocation0 [shape = 'u32[]', space=smem, size = 0x4, offset = 0x4, fixed_abs, tag = 'smem constant byte address 0x4 - core index']
  #allocation1 [shape = 'u32[144,128]{1,0:T(1,128)}', space=vmem, size = 0x12000, scoped, tag = 'internal scratch']
  %s0 = inlined_call_operand.vmem [shape: f32[8,128], index: 0, kind: input, shape index: {}]
  %s1 = inlined_call_operand.vmem [shape: f32[128,32], index: 1, kind: input, shape index: {}]
  %s2 = inlined_call_operand.vmem [shape: f32[32,128], index: 2, kind: input, shape index: {}]
  %s3 = inlined_call_operand.hbm [shape: f32[8,128], index: 3, kind: output, shape index: {}]
  %s4 = sld [smem:[#allocation0]]
  $region22: #{tpu_custom_call.1} parent=0
    _
  %s6 = ssub.s32 1, %s4
  %s7 = scalar_select 0, %s6, %s4
  $region1: #{tpu_custom_call.1} parent=0
    #allocation2 [shape = 'u8[4096]{0}', space=vmem, size = 0x1000, scoped, tag = 'output window, operand 0, single buffered']
    #allocation3 [shape = 's32[1]{0}', space=sflag, size = 0x4, scoped, tag = 'scoped memory for tpu_custom_call.1']
    %8 = vsyncpa [#allocation3], 0
    // Predicated region
    $region2: #{tpu_custom_call.1} parent=1 // pred_check
      _
    $region3: #{tpu_custom_call.1} parent=1 // pred_check_branch
      %10 = sbr.rel (0) target = $region5
    $region4: #{tpu_custom_call.1} parent=1 // pred_region
      _
    $region5: #{tpu_custom_call.1} parent=1 // pred_fallthru
      _
    // Predicated region
    $region6: #{tpu_custom_call.1} parent=1 // pred_check
      _
    $region7: #{tpu_custom_call.1} parent=1 // pred_check_branch
      %12 = sbr.rel (0) target = $region9
    $region8: #{tpu_custom_call.1} parent=1 // pred_region
      _
    $region9: #{tpu_custom_call.1} parent=1 // pred_fallthru
      _
    // Predicated region
    $region10: #{tpu_custom_call.1} parent=1 // pred_check
      _
    $region11: #{tpu_custom_call.1} parent=1 // pred_check_branch
      %14 = sbr.rel (0) target = $region13
    $region12: #{tpu_custom_call.1} parent=1 // pred_region
      _
    $region13: #{tpu_custom_call.1} parent=1 // pred_fallthru
      _
    %v15 = vld [vmem:[%s0] sm:$0xff]
    %v16 = vld [vmem:[%s1] sm:$0xff]
    %v17 = vld [vmem:[%s1 + $0x8] sm:$0xff]
    %v18 = vld [vmem:[%s1 + $0x10] sm:$0xff]
    %v19 = vld [vmem:[%s1 + $0x18] sm:$0xff]
    %v20 = vld [vmem:[%s1 + $0x20] sm:$0xff]
    %v21 = vld [vmem:[%s1 + $0x28] sm:$0xff]
    %v22 = vld [vmem:[%s1 + $0x30] sm:$0xff]
    %v23 = vld [vmem:[%s1 + $0x38] sm:$0xff]
    %v24 = vld [vmem:[%s1 + $0x40] sm:$0xff]
    %v25 = vld [vmem:[%s1 + $0x48] sm:$0xff]
    %v26 = vld [vmem:[%s1 + $0x50] sm:$0xff]
    %v27 = vld [vmem:[%s1 + $0x58] sm:$0xff]
    %v28 = vld [vmem:[%s1 + $0x60] sm:$0xff]
    %v29 = vld [vmem:[%s1 + $0x68] sm:$0xff]
    %v30 = vld [vmem:[%s1 + $0x70] sm:$0xff]
    %v31 = vld [vmem:[%s1 + $0x78] sm:$0xff]
    %32 = vmatprep.subr.mxu0 0.0
    %33 = vmatpush1.msra.mxu0 %v31
    %34 = vmatprep.subr.mxu0 0.0
    %35 = vmatpush1.msra.mxu0 %v30
    %36 = vmatprep.subr.mxu0 0.0
    %37 = vmatpush1.msra.mxu0 %v29
    %38 = vmatprep.subr.mxu0 0.0
    %39 = vmatpush1.msra.mxu0 %v28
    %40 = vmatprep.subr.mxu0 0.0
    %41 = vmatpush1.msra.mxu0 %v27
    %42 = vmatprep.subr.mxu0 0.0
    %43 = vmatpush1.msra.mxu0 %v26
    %44 = vmatprep.subr.mxu0 0.0
    %45 = vmatpush1.msra.mxu0 %v25
    %46 = vmatprep.subr.mxu0 0.0
    %47 = vmatpush1.msra.mxu0 %v24
    %48 = vmatprep.subr.mxu0 0.0
    %49 = vmatpush1.msra.mxu0 %v23
    %50 = vmatprep.subr.mxu0 0.0
    %51 = vmatpush1.msra.mxu0 %v22
    %52 = vmatprep.subr.mxu0 0.0
    %53 = vmatpush1.msra.mxu0 %v21
    %54 = vmatprep.subr.mxu0 0.0
    %55 = vmatpush1.msra.mxu0 %v20
    %56 = vmatprep.subr.mxu0 0.0
    %57 = vmatpush1.msra.mxu0 %v19
    %58 = vmatprep.subr.mxu0 0.0
    %59 = vmatpush1.msra.mxu0 %v18
    %60 = vmatprep.subr.mxu0 0.0
    %61 = vmatpush1.msra.mxu0 %v17
    %62 = vmatprep.subr.mxu0 0.0
    %63 = vmatpush1.msra.mxu0 %v16
    %64 = vmatprep.subr.mxu0 0.0
    %65 = vmatpush2.msra.mxu0 0.0
    %66 = vmatprep.subr.mxu0 0.0
    %67 = vmatpush2.msra.mxu0 0.0
    %68 = vmatprep.subr.mxu0 0.0
    %69 = vmatpush2.msra.mxu0 0.0
    %70 = vmatprep.subr.mxu0 0.0
    %71 = vmatpush2.msra.mxu0 0.0
    %72 = vmatprep.subr.mxu0 0.0
    %73 = vmatpush2.msra.mxu0 0.0
    %74 = vmatprep.subr.mxu0 0.0
    %75 = vmatpush2.msra.mxu0 0.0
    %76 = vmatprep.subr.mxu0 0.0
    %77 = vmatpush2.msra.mxu0 0.0
    %78 = vmatprep.subr.mxu0 0.0
    %79 = vmatpush2.msra.mxu0 0.0
    %80 = vmatprep.subr.mxu0 0.0
    %81 = vmatpush2.msra.mxu0 0.0
    %82 = vmatprep.subr.mxu0 0.0
    %83 = vmatpush2.msra.mxu0 0.0
    %84 = vmatprep.subr.mxu0 0.0
    %85 = vmatpush2.msra.mxu0 0.0
    %86 = vmatprep.subr.mxu0 0.0
    %87 = vmatpush2.msra.mxu0 0.0
    %88 = vmatprep.subr.mxu0 0.0
    %89 = vmatpush2.msra.mxu0 0.0
    %90 = vmatprep.subr.mxu0 0.0
    %91 = vmatpush2.msra.mxu0 0.0
    %92 = vmatprep.subr.mxu0 0.0
    %93 = vmatpush2.msra.mxu0 0.0
    %94 = vmatprep.subr.mxu0 0.0
    %95 = vmatpush2.msra.mxu0 0.0
    %96 = vmatprep.mubr.f32.mxu0 0.0
    %97 = vmatmul.mubr.f32.gmra.mxu0 %v15
    %v98 = vpop.f32.mrf.mxu0
    %v99 = vadd.f32 0.0, %v98
    %v100 = vpop.f32.mrf.mxu0
    %101 = vdwg.mxu0
    %v102 = vmax.f32 %v99, 0.0
    %v103 = vld [vmem:[%s2] sm:$0xff]
    %v104 = vld [vmem:[%s2 + $0x8] sm:$0xff]
    %v105 = vld [vmem:[%s2 + $0x10] sm:$0xff]
    %v106 = vld [vmem:[%s2 + $0x18] sm:$0xff]
    %vm107 = vcmask 261120
    %v109 = vsel %vm107, %v102, 0
    %111 = vmatprep.subr.mxu0 0.0
    %112 = vmatpush1.msra.mxu0 0.0
    %113 = vmatprep.subr.mxu0 0.0
    %114 = vmatpush1.msra.mxu0 0.0
    %115 = vmatprep.subr.mxu0 0.0
    %116 = vmatpush1.msra.mxu0 0.0
    %117 = vmatprep.subr.mxu0 0.0
    %118 = vmatpush1.msra.mxu0 0.0
    %119 = vmatprep.subr.mxu0 0.0
    %120 = vmatpush1.msra.mxu0 0.0
    %121 = vmatprep.subr.mxu0 0.0
    %122 = vmatpush1.msra.mxu0 0.0
    %123 = vmatprep.subr.mxu0 0.0
    %124 = vmatpush1.msra.mxu0 0.0
    %125 = vmatprep.subr.mxu0 0.0
    %126 = vmatpush1.msra.mxu0 0.0
    %127 = vmatprep.subr.mxu0 0.0
    %128 = vmatpush1.msra.mxu0 0.0
    %129 = vmatprep.subr.mxu0 0.0
    %130 = vmatpush1.msra.mxu0 0.0
    %131 = vmatprep.subr.mxu0 0.0
    %132 = vmatpush1.msra.mxu0 0.0
    %133 = vmatprep.subr.mxu0 0.0
    %134 = vmatpush1.msra.mxu0 0.0
    %135 = vmatprep.subr.mxu0 0.0
    %136 = vmatpush1.msra.mxu0 %v106
    %137 = vmatprep.subr.mxu0 0.0
    %138 = vmatpush1.msra.mxu0 %v105
    %139 = vmatprep.subr.mxu0 0.0
    %140 = vmatpush1.msra.mxu0 %v104
    %141 = vmatprep.subr.mxu0 0.0
    %142 = vmatpush1.msra.mxu0 %v103
    %143 = vmatprep.subr.mxu0 0.0
    %144 = vmatpush2.msra.mxu0 0.0
    %145 = vmatprep.subr.mxu0 0.0
    %146 = vmatpush2.msra.mxu0 0.0
    %147 = vmatprep.subr.mxu0 0.0
    %148 = vmatpush2.msra.mxu0 0.0
    %149 = vmatprep.subr.mxu0 0.0
    %150 = vmatpush2.msra.mxu0 0.0
    %151 = vmatprep.subr.mxu0 0.0
    %152 = vmatpush2.msra.mxu0 0.0
    %153 = vmatprep.subr.mxu0 0.0
    %154 = vmatpush2.msra.mxu0 0.0
    %155 = vmatprep.subr.mxu0 0.0
    %156 = vmatpush2.msra.mxu0 0.0
    %157 = vmatprep.subr.mxu0 0.0
    %158 = vmatpush2.msra.mxu0 0.0
    %159 = vmatprep.subr.mxu0 0.0
    %160 = vmatpush2.msra.mxu0 0.0
    %161 = vmatprep.subr.mxu0 0.0
    %162 = vmatpush2.msra.mxu0 0.0
    %163 = vmatprep.subr.mxu0 0.0
    %164 = vmatpush2.msra.mxu0 0.0
    %165 = vmatprep.subr.mxu0 0.0
    %166 = vmatpush2.msra.mxu0 0.0
    %167 = vmatprep.subr.mxu0 0.0
    %168 = vmatpush2.msra.mxu0 0.0
    %169 = vmatprep.subr.mxu0 0.0
    %170 = vmatpush2.msra.mxu0 0.0
    %171 = vmatprep.subr.mxu0 0.0
    %172 = vmatpush2.msra.mxu0 0.0
    %173 = vmatprep.subr.mxu0 0.0
    %174 = vmatpush2.msra.mxu0 0.0
    %175 = vmatprep.mubr.f32.mxu0 0.0
    %176 = vmatmul.mubr.f32.gmra.mxu0 %v109
    %v177 = vpop.f32.mrf.mxu0
    %v178 = vadd.f32 0.0, %v177
    %v179 = vpop.f32.mrf.mxu0
    %180 = vdwg.mxu0
    %v181 = vmax.f32 %v178, 0.0
    %182 = vst [vmem:[#allocation2] sm:$0xff] %v181
    // Predicated region
    $region14: #{tpu_custom_call.1} parent=1 // pred_check
      _
    $region15: #{tpu_custom_call.1} parent=1 // pred_check_branch
      %184 = sbr.rel (0) target = $region17
    $region16: #{tpu_custom_call.1} parent=1 // pred_region
      %s186 = ssub.s32 128, 128
      %187 = vsyncadd [#allocation3], %s186
      %s189 = sshll.u32 [#allocation2], 4
      %s190 = int_to_ptr.vmem [resolvable:$true] %s189
      %192 = dma.vmem_to_hbm [thread:$0]  %s190, 128, %s3, [#allocation3]
    $region17: #{tpu_custom_call.1} parent=1 // pred_fallthru
      _
    // Predicated region
    $region18: #{tpu_custom_call.1} parent=1 // pred_check
      _
    $region19: #{tpu_custom_call.1} parent=1 // pred_check_branch
      %194 = sbr.rel (0) target = $region21
    $region20: #{tpu_custom_call.1} parent=1 // pred_region
      %195 = dma.done [#allocation3], 128
    $region21: #{tpu_custom_call.1} parent=1 // pred_fallthru
      _
    %196 = vsyncpa [#allocation3], 1

</llo_original>
